<compile_context>
chip_gen: v7x
topology: tpu7x:2x2x1
jax: 0.10.0
libtpu: 0.0.40
codegen_flags: <defaults>
</compile_context>

<pallas_src>
import jax
import jax.numpy as jnp
from jax.experimental import pallas as pl
from jax.experimental.pallas import tpu as pltpu

_LANE = 128  # TPU vreg lane width


def _round_up(n, m):
    return ((n + m - 1) // m) * m


def _discriminator_kernel(x_ref, a_ref, w1_ref, b1_ref, w2_ref, b2_ref, out_ref):
    # Shapes per grid step (batch tile TB in lanes):
    #   x_ref : (state_dim, TB)                 a_ref : (action_dim, TB)
    #   w1_ref: (hidden, state_dim+action_dim)  b1_ref: (hidden, 1)
    #   w2_ref: (hidden, 1)                     b2_ref: (1, 1)  [SMEM scalar]
    #   out_ref: (1, TB)
    state_dim = x_ref.shape[0]
    action_dim = a_ref.shape[0]

    w1 = w1_ref[...]                       # (H, in_dim), tiny, VMEM-resident

    # fc1 as VPU broadcast-FMAs (fuses the concat; in_dim is tiny so no MXU,
    # no K padding, no (B, 2) tensor round-tripped through HBM).  The Python
    # loops are unrolled at trace time (state_dim/action_dim are tiny).
    h = b1_ref[...]                        # (H, 1) -> broadcasts across lanes
    for s in range(state_dim):
        h = h + w1[:, s:s + 1] * x_ref[s:s + 1, :]
    for j in range(action_dim):
        h = h + w1[:, state_dim + j:state_dim + j + 1] * a_ref[j:j + 1, :]
    h = jnp.maximum(h, 0.0)                # ReLU, (H, TB)

    # fc2 (N=1) as multiply + sublane reduction (VPU + XLU; MXU stays idle).
    logit = jnp.sum(h * w2_ref[...], axis=0, keepdims=True) + b2_ref[0, 0]

    out_ref[...] = jax.nn.sigmoid(logit)   # (1, TB), lane-dense store


def discriminator_forward(x, a, w1, b1, w2, b2, *, batch_tile=1024):
    """x: (B, state_dim), a: (B, action_dim).  Returns (B, 1) probabilities.

    Weight layout matches `y = x @ w1 + b1`: w1 (in_dim, hidden), w2 (hidden, 1).
    """
    B, state_dim = x.shape
    _, action_dim = a.shape
    in_dim, hidden = w1.shape
    assert in_dim == state_dim + action_dim

    # Batch-in-lanes layout: (features, B).  For feature dim == 1 the
    # transpose is just a free reshape.
    x_t = jnp.transpose(x).astype(jnp.float32)       # (state_dim, B)
    a_t = jnp.transpose(a).astype(jnp.float32)       # (action_dim, B)

    # Pick a lane-aligned batch tile and pad B up to a multiple of it.
    tb = min(batch_tile, _round_up(B, _LANE))
    tb = _round_up(tb, _LANE)
    Bp = _round_up(B, tb)
    if Bp != B:
        x_t = jnp.pad(x_t, ((0, 0), (0, Bp - B)))
        a_t = jnp.pad(a_t, ((0, 0), (0, Bp - B)))

    w1_t = jnp.transpose(w1).astype(jnp.float32)      # (hidden, in_dim)
    b1_col = b1.reshape(hidden, 1).astype(jnp.float32)
    w2_col = w2.reshape(hidden, 1).astype(jnp.float32)
    b2_smem = b2.reshape(1, 1).astype(jnp.float32)

    grid = (Bp // tb,)

    out = pl.pallas_call(
        _discriminator_kernel,
        out_shape=jax.ShapeDtypeStruct((1, Bp), jnp.float32),
        grid=grid,
        in_specs=[
            pl.BlockSpec((state_dim, tb), lambda i: (0, i)),    # x tile
            pl.BlockSpec((action_dim, tb), lambda i: (0, i)),   # a tile
            pl.BlockSpec((hidden, in_dim), lambda i: (0, 0)),   # w1 (resident)
            pl.BlockSpec((hidden, 1), lambda i: (0, 0)),        # b1 (resident)
            pl.BlockSpec((hidden, 1), lambda i: (0, 0)),        # w2 (resident)
            pl.BlockSpec(memory_space=pltpu.MemorySpace.SMEM),  # b2 scalar
        ],
        out_specs=pl.BlockSpec((1, tb), lambda i: (0, i)),      # lane-dense out
        compiler_params=pltpu.CompilerParams(
            dimension_semantics=("parallel",)),
    )(x_t, a_t, w1_t, b1_col, w2_col, b2_smem)

    return jnp.transpose(out[:, :B])                            # (B, 1)


def init_params(key, state_dim, hidden_dim, action_dim):
    """Deterministic synthetic parameters matching the PyTorch module's shapes."""
    k1, k2, k3, k4 = jax.random.split(key, 4)
    in_dim = state_dim + action_dim
    # fc1: Linear(state_dim + action_dim, hidden_dim)
    lim1 = 1.0 / jnp.sqrt(in_dim)
    w1 = jax.random.uniform(k1, (in_dim, hidden_dim), jnp.float32, -lim1, lim1)
    b1 = jax.random.uniform(k2, (hidden_dim,), jnp.float32, -lim1, lim1)
    # fc2: Linear(hidden_dim, 1)
    lim2 = 1.0 / jnp.sqrt(hidden_dim)
    w2 = jax.random.uniform(k3, (hidden_dim, 1), jnp.float32, -lim2, lim2)
    b2 = jax.random.uniform(k4, (1,), jnp.float32, -lim2, lim2)
    return w1, b1, w2, b2


def _reference(x, a, w1, b1, w2, b2):
    cat = jnp.concatenate([x, a], axis=1)
    return jax.nn.sigmoid(jnp.maximum(cat @ w1 + b1, 0.0) @ w2 + b2)


if __name__ == "__main__":
    state_dim, hidden_dim, action_dim = 1, 128, 1

    key = jax.random.PRNGKey(0)
    kp, kx, ka, kx2, ka2 = jax.random.split(key, 5)
    w1, b1, w2, b2 = init_params(kp, state_dim, hidden_dim, action_dim)

    # Small batch (spec-scale): single grid step.
    batch = 8
    x = jax.random.normal(kx, (batch, state_dim), jnp.float32)
    a = jax.random.normal(ka, (batch, action_dim), jnp.float32)
    out = jax.block_until_ready(discriminator_forward(x, a, w1, b1, w2, b2))
    ref = _reference(x, a, w1, b1, w2, b2)
    assert out.shape == (batch, 1)
    assert jnp.allclose(out, ref, atol=1e-5, rtol=1e-5), "mismatch vs reference (B=8)"

    # Training-scale batch (exercises the batch padding / lane-tile path).
    batch2 = 1000
    x2 = jax.random.normal(kx2, (batch2, state_dim), jnp.float32)
    a2 = jax.random.normal(ka2, (batch2, action_dim), jnp.float32)
    out2 = jax.block_until_ready(discriminator_forward(x2, a2, w1, b1, w2, b2))
    ref2 = _reference(x2, a2, w1, b1, w2, b2)
    assert out2.shape == (batch2, 1)
    assert jnp.allclose(out2, ref2, atol=1e-5, rtol=1e-5), "mismatch vs reference (B=1000)"

    print("KERNEL_OK")
</pallas_src>

<mosaic_0001>
module attributes {stable_mosaic.version = 11 : i64} {
  func.func @_discriminator_kernel(%arg0: i32, %arg1: memref<1x128xf32, #tpu.memory_space<vmem>>, %arg2: memref<1x128xf32, #tpu.memory_space<vmem>>, %arg3: memref<128x2xf32, #tpu.memory_space<vmem>>, %arg4: memref<128x1xf32, #tpu.memory_space<vmem>>, %arg5: memref<128x1xf32, #tpu.memory_space<vmem>>, %arg6: memref<1x1xf32, #tpu.memory_space<smem>>, %arg7: memref<1x128xf32, #tpu.memory_space<vmem>>) attributes {dimension_semantics = [#tpu.dimension_semantics<parallel>], iteration_bounds = array<i64: 1>, scalar_prefetch = 0 : i64, scratch_operands = 0 : i64, tpu.core_type = #tpu.core_type<tc>, window_params = [{transform_indices = @transform_0, window_bounds = array<i64: 1, 128>}, {transform_indices = @transform_1, window_bounds = array<i64: 1, 128>}, {pipeline_mode = #tpu.pipeline_mode<synchronous>, transform_indices = @transform_2, window_bounds = array<i64: 128, 2>}, {pipeline_mode = #tpu.pipeline_mode<synchronous>, transform_indices = @transform_3, window_bounds = array<i64: 128, 1>}, {pipeline_mode = #tpu.pipeline_mode<synchronous>, transform_indices = @transform_4, window_bounds = array<i64: 128, 1>}, {transform_indices = @transform_5, window_bounds = array<i64: 1, 1>}, {transform_indices = @transform_6, window_bounds = array<i64: 1, 128>}]} {
    %c0 = arith.constant 0 : index
    %c0_0 = arith.constant 0 : index
    %0 = vector.load %arg3[%c0, %c0_0] : memref<128x2xf32, #tpu.memory_space<vmem>>, vector<128x2xf32>
    %c0_1 = arith.constant 0 : index
    %c0_2 = arith.constant 0 : index
    %1 = vector.load %arg4[%c0_1, %c0_2] : memref<128x1xf32, #tpu.memory_space<vmem>>, vector<128x1xf32>
    %2 = vector.extract_strided_slice %0 {offsets = [0, 0], sizes = [128, 1], strides = [1, 1]} : vector<128x2xf32> to vector<128x1xf32>
    %c0_3 = arith.constant 0 : index
    %c0_4 = arith.constant 0 : index
    %3 = vector.load %arg1[%c0_3, %c0_4] : memref<1x128xf32, #tpu.memory_space<vmem>>, vector<1x128xf32>
    %4 = vector.broadcast %2 : vector<128x1xf32> to vector<128x128xf32>
    %5 = vector.broadcast %3 : vector<1x128xf32> to vector<128x128xf32>
    %6 = arith.mulf %4, %5 : vector<128x128xf32>
    %7 = vector.broadcast %1 : vector<128x1xf32> to vector<128x128xf32>
    %8 = arith.addf %7, %6 : vector<128x128xf32>
    %9 = vector.extract_strided_slice %0 {offsets = [0, 1], sizes = [128, 1], strides = [1, 1]} : vector<128x2xf32> to vector<128x1xf32>
    %c0_5 = arith.constant 0 : index
    %c0_6 = arith.constant 0 : index
    %10 = vector.load %arg2[%c0_5, %c0_6] : memref<1x128xf32, #tpu.memory_space<vmem>>, vector<1x128xf32>
    %11 = vector.broadcast %9 : vector<128x1xf32> to vector<128x128xf32>
    %12 = vector.broadcast %10 : vector<1x128xf32> to vector<128x128xf32>
    %13 = arith.mulf %11, %12 : vector<128x128xf32>
    %14 = arith.addf %8, %13 : vector<128x128xf32>
    %cst = arith.constant 0.000000e+00 : f32
    %15 = vector.broadcast %cst : f32 to vector<128x128xf32>
    %16 = arith.maximumf %14, %15 : vector<128x128xf32>
    %c0_7 = arith.constant 0 : index
    %c0_8 = arith.constant 0 : index
    %17 = vector.load %arg5[%c0_7, %c0_8] : memref<128x1xf32, #tpu.memory_space<vmem>>, vector<128x1xf32>
    %18 = vector.broadcast %17 : vector<128x1xf32> to vector<128x128xf32>
    %19 = arith.mulf %16, %18 : vector<128x128xf32>
    %cst_9 = arith.constant dense<0.000000e+00> : vector<128xf32>
    %20 = vector.multi_reduction <add>, %19, %cst_9 [0] : vector<128x128xf32> to vector<128xf32>
    %21 = vector.shape_cast %20 : vector<128xf32> to vector<1x128xf32>
    %c0_10 = arith.constant 0 : index
    %c0_11 = arith.constant 0 : index
    %22 = memref.load %arg6[%c0_10, %c0_11] : memref<1x1xf32, #tpu.memory_space<smem>>
    %23 = vector.broadcast %22 : f32 to vector<1x128xf32>
    %24 = arith.addf %21, %23 : vector<1x128xf32>
    %25 = arith.negf %24 : vector<1x128xf32>
    %26 = math.exp %25 : vector<1x128xf32>
    %cst_12 = arith.constant 1.000000e+00 : f32
    %27 = vector.broadcast %cst_12 : f32 to vector<1x128xf32>
    %28 = arith.addf %27, %26 : vector<1x128xf32>
    %29 = arith.divf %27, %28 : vector<1x128xf32>
    %c0_13 = arith.constant 0 : index
    %c0_14 = arith.constant 0 : index
    %30 = vector.load %arg7[%c0_13, %c0_14] : memref<1x128xf32, #tpu.memory_space<vmem>>, vector<1x128xf32>
    tpu.vector_store %arg7[%c0_13, %c0_14], %29 {strides = array<i32>} : memref<1x128xf32, #tpu.memory_space<vmem>>, vector<1x128xf32>,
    return
  }
  func.func @transform_0(%arg0: i32) -> (i32, i32) {
    %c0_i32 = arith.constant 0 : i32
    %c0_i32_0 = arith.constant 0 : i32
    return %c0_i32, %arg0 : i32, i32
  }
  func.func @transform_1(%arg0: i32) -> (i32, i32) {
    %c0_i32 = arith.constant 0 : i32
    %c0_i32_0 = arith.constant 0 : i32
    return %c0_i32, %arg0 : i32, i32
  }
  func.func @transform_2(%arg0: i32) -> (i32, i32) {
    %c0_i32 = arith.constant 0 : i32
    %c0_i32_0 = arith.constant 0 : i32
    %c0_i32_1 = arith.constant 0 : i32
    return %c0_i32, %c0_i32_0 : i32, i32
  }
  func.func @transform_3(%arg0: i32) -> (i32, i32) {
    %c0_i32 = arith.constant 0 : i32
    %c0_i32_0 = arith.constant 0 : i32
    %c0_i32_1 = arith.constant 0 : i32
    return %c0_i32, %c0_i32_0 : i32, i32
  }
  func.func @transform_4(%arg0: i32) -> (i32, i32) {
    %c0_i32 = arith.constant 0 : i32
    %c0_i32_0 = arith.constant 0 : i32
    %c0_i32_1 = arith.constant 0 : i32
    return %c0_i32, %c0_i32_0 : i32, i32
  }
  func.func @transform_5(%arg0: i32) -> (i32, i32) {
    %c0_i32 = arith.constant 0 : i32
    %c0_i32_0 = arith.constant 0 : i32
    %c0_i32_1 = arith.constant 0 : i32
    return %c0_i32, %c0_i32_0 : i32, i32
  }
  func.func @transform_6(%arg0: i32) -> (i32, i32) {
    %c0_i32 = arith.constant 0 : i32
    %c0_i32_0 = arith.constant 0 : i32
    return %c0_i32, %arg0 : i32, i32
  }
}

</mosaic_0001>

<llo_original>
// kernel: tpu_custom_call.1
$region0: #{tpu_custom_call.1}
  #allocation0 [shape = 'u32[]', space=smem, size = 0x4, offset = 0x4, fixed_abs, tag = 'smem constant byte address 0x4 - core index']
  #allocation1 [shape = 'u32[144,128]{1,0:T(1,128)}', space=vmem, size = 0x12000, scoped, tag = 'internal scratch']
  #allocation2 [shape = 'f32[1,1]{1,0:T(1,128)S(6)}', space=smem, size = 0x200, scoped, tag = 'scoped memory for tpu_custom_call.1']
  %s0 = inlined_call_operand.vmem [shape: f32[1,128], index: 0, kind: input, shape index: {}]
  %s1 = inlined_call_operand.vmem [shape: f32[1,128], index: 1, kind: input, shape index: {}]
  %s2 = inlined_call_operand.vmem [shape: f32[128,2], index: 2, kind: input, shape index: {}]
  %s3 = inlined_call_operand.vmem [shape: f32[128,1], index: 3, kind: input, shape index: {}]
  %s4 = inlined_call_operand.vmem [shape: f32[128,1], index: 4, kind: input, shape index: {}]
  %s5 = inlined_call_operand.<no memory space> [shape: f32[1,1], index: 5, kind: input, shape index: {}]
  %s6 = inlined_call_operand.hbm [shape: f32[1,128], index: 6, kind: output, shape index: {}]
  %s7 = sld [smem:[#allocation0]]
  $region34: #{tpu_custom_call.1} parent=0
    _
  %s9 = ssub.s32 1, %s7
  %s10 = scalar_select 0, %s9, %s7
  %11 = sst [smem:[#allocation2]] %s5
  $region1: #{tpu_custom_call.1} parent=0
    #allocation3 [shape = 'u8[512]{0}', space=vmem, size = 0x400, scoped, tag = 'output window, operand 0, single buffered']
    #allocation4 [shape = 's32[1]{0}', space=sflag, size = 0x4, scoped, tag = 'scoped memory for tpu_custom_call.1']
    %12 = vsyncpa [#allocation4], 0
    // Predicated region
    $region2: #{tpu_custom_call.1} parent=1 // pred_check
      _
    $region3: #{tpu_custom_call.1} parent=1 // pred_check_branch
      %14 = sbr.rel (0) target = $region5
    $region4: #{tpu_custom_call.1} parent=1 // pred_region
      _
    $region5: #{tpu_custom_call.1} parent=1 // pred_fallthru
      _
    // Predicated region
    $region6: #{tpu_custom_call.1} parent=1 // pred_check
      _
    $region7: #{tpu_custom_call.1} parent=1 // pred_check_branch
      %16 = sbr.rel (0) target = $region9
    $region8: #{tpu_custom_call.1} parent=1 // pred_region
      _
    $region9: #{tpu_custom_call.1} parent=1 // pred_fallthru
      _
    // Predicated region
    $region10: #{tpu_custom_call.1} parent=1 // pred_check
      _
    $region11: #{tpu_custom_call.1} parent=1 // pred_check_branch
      %18 = sbr.rel (0) target = $region13
    $region12: #{tpu_custom_call.1} parent=1 // pred_region
      _
    $region13: #{tpu_custom_call.1} parent=1 // pred_fallthru
      _
    // Predicated region
    $region14: #{tpu_custom_call.1} parent=1 // pred_check
      _
    $region15: #{tpu_custom_call.1} parent=1 // pred_check_branch
      %20 = sbr.rel (0) target = $region17
    $region16: #{tpu_custom_call.1} parent=1 // pred_region
      _
    $region17: #{tpu_custom_call.1} parent=1 // pred_fallthru
      _
    // Predicated region
    $region18: #{tpu_custom_call.1} parent=1 // pred_check
      _
    $region19: #{tpu_custom_call.1} parent=1 // pred_check_branch
      %22 = sbr.rel (0) target = $region21
    $region20: #{tpu_custom_call.1} parent=1 // pred_region
      _
    $region21: #{tpu_custom_call.1} parent=1 // pred_fallthru
      _
    // Predicated region
    $region22: #{tpu_custom_call.1} parent=1 // pred_check
      _
    $region23: #{tpu_custom_call.1} parent=1 // pred_check_branch
      %24 = sbr.rel (0) target = $region25
    $region24: #{tpu_custom_call.1} parent=1 // pred_region
      _
    $region25: #{tpu_custom_call.1} parent=1 // pred_fallthru
      _
    %v25 = vld [vmem:[%s2] sm:$0xff]
    %v26 = vld [vmem:[%s2 + $0x8] sm:$0xff]
    %v27 = vld [vmem:[%s2 + $0x10] sm:$0xff]
    %v28 = vld [vmem:[%s2 + $0x18] sm:$0xff]
    %v29 = vld [vmem:[%s2 + $0x20] sm:$0xff]
    %v30 = vld [vmem:[%s2 + $0x28] sm:$0xff]
    %v31 = vld [vmem:[%s2 + $0x30] sm:$0xff]
    %v32 = vld [vmem:[%s2 + $0x38] sm:$0xff]
    %v33 = vld [vmem:[%s2 + $0x40] sm:$0xff]
    %v34 = vld [vmem:[%s2 + $0x48] sm:$0xff]
    %v35 = vld [vmem:[%s2 + $0x50] sm:$0xff]
    %v36 = vld [vmem:[%s2 + $0x58] sm:$0xff]
    %v37 = vld [vmem:[%s2 + $0x60] sm:$0xff]
    %v38 = vld [vmem:[%s2 + $0x68] sm:$0xff]
    %v39 = vld [vmem:[%s2 + $0x70] sm:$0xff]
    %v40 = vld [vmem:[%s2 + $0x78] sm:$0xff]
    %v41 = vld [vmem:[%s3] sm:$0xff]
    %v42 = vld [vmem:[%s3 + $0x8] sm:$0xff]
    %v43 = vld [vmem:[%s3 + $0x10] sm:$0xff]
    %v44 = vld [vmem:[%s3 + $0x18] sm:$0xff]
    %v45 = vld [vmem:[%s3 + $0x20] sm:$0xff]
    %v46 = vld [vmem:[%s3 + $0x28] sm:$0xff]
    %v47 = vld [vmem:[%s3 + $0x30] sm:$0xff]
    %v48 = vld [vmem:[%s3 + $0x38] sm:$0xff]
    %v49 = vld [vmem:[%s3 + $0x40] sm:$0xff]
    %v50 = vld [vmem:[%s3 + $0x48] sm:$0xff]
    %v51 = vld [vmem:[%s3 + $0x50] sm:$0xff]
    %v52 = vld [vmem:[%s3 + $0x58] sm:$0xff]
    %v53 = vld [vmem:[%s3 + $0x60] sm:$0xff]
    %v54 = vld [vmem:[%s3 + $0x68] sm:$0xff]
    %v55 = vld [vmem:[%s3 + $0x70] sm:$0xff]
    %v56 = vld [vmem:[%s3 + $0x78] sm:$0xff]
    %v57 = vld [vmem:[%s0] sm:$0x1]
    %59 = vset.pattern.permute.xlu0 0
    %60 = vperm.xlu0 %59, %v25
    %v61 = vpop.permute.xlu0 %60
    %64 = vset.pattern.permute.xlu0 0
    %65 = vperm.xlu0 %64, %v26
    %v66 = vpop.permute.xlu0 %65
    %69 = vset.pattern.permute.xlu0 0
    %70 = vperm.xlu0 %69, %v27
    %v71 = vpop.permute.xlu0 %70
    %74 = vset.pattern.permute.xlu0 0
    %75 = vperm.xlu0 %74, %v28
    %v76 = vpop.permute.xlu0 %75
    %79 = vset.pattern.permute.xlu0 0
    %80 = vperm.xlu0 %79, %v29
    %v81 = vpop.permute.xlu0 %80
    %84 = vset.pattern.permute.xlu0 0
    %85 = vperm.xlu0 %84, %v30
    %v86 = vpop.permute.xlu0 %85
    %89 = vset.pattern.permute.xlu0 0
    %90 = vperm.xlu0 %89, %v31
    %v91 = vpop.permute.xlu0 %90
    %94 = vset.pattern.permute.xlu0 0
    %95 = vperm.xlu0 %94, %v32
    %v96 = vpop.permute.xlu0 %95
    %99 = vset.pattern.permute.xlu0 0
    %100 = vperm.xlu0 %99, %v33
    %v101 = vpop.permute.xlu0 %100
    %104 = vset.pattern.permute.xlu0 0
    %105 = vperm.xlu0 %104, %v34
    %v106 = vpop.permute.xlu0 %105
    %109 = vset.pattern.permute.xlu0 0
    %110 = vperm.xlu0 %109, %v35
    %v111 = vpop.permute.xlu0 %110
    %114 = vset.pattern.permute.xlu0 0
    %115 = vperm.xlu0 %114, %v36
    %v116 = vpop.permute.xlu0 %115
    %119 = vset.pattern.permute.xlu0 0
    %120 = vperm.xlu0 %119, %v37
    %v121 = vpop.permute.xlu0 %120
    %124 = vset.pattern.permute.xlu0 0
    %125 = vperm.xlu0 %124, %v38
    %v126 = vpop.permute.xlu0 %125
    %129 = vset.pattern.permute.xlu0 0
    %130 = vperm.xlu0 %129, %v39
    %v131 = vpop.permute.xlu0 %130
    %134 = vset.pattern.permute.xlu0 0
    %135 = vperm.xlu0 %134, %v40
    %v136 = vpop.permute.xlu0 %135
    %v139 = vlaneseq
    %v140 = vshrl.u32 %v139, 7
    %v141 = vsub.s32 0, %v140
    %v142 = vrot.slane %v57, %v141
    %v144 = vmul.f32 %v61, %v142
    %v145 = vmul.f32 %v66, %v142
    %v146 = vmul.f32 %v71, %v142
    %v147 = vmul.f32 %v76, %v142
    %v148 = vmul.f32 %v81, %v142
    %v149 = vmul.f32 %v86, %v142
    %v150 = vmul.f32 %v91, %v142
    %v151 = vmul.f32 %v96, %v142
    %v152 = vmul.f32 %v101, %v142
    %v153 = vmul.f32 %v106, %v142
    %v154 = vmul.f32 %v111, %v142
    %v155 = vmul.f32 %v116, %v142
    %v156 = vmul.f32 %v121, %v142
    %v157 = vmul.f32 %v126, %v142
    %v158 = vmul.f32 %v131, %v142
    %v159 = vmul.f32 %v136, %v142
    %161 = vset.pattern.permute.xlu0 0
    %162 = vperm.xlu0 %161, %v41
    %v163 = vpop.permute.xlu0 %162
    %166 = vset.pattern.permute.xlu0 0
    %167 = vperm.xlu0 %166, %v42
    %v168 = vpop.permute.xlu0 %167
    %171 = vset.pattern.permute.xlu0 0
    %172 = vperm.xlu0 %171, %v43
    %v173 = vpop.permute.xlu0 %172
    %176 = vset.pattern.permute.xlu0 0
    %177 = vperm.xlu0 %176, %v44
    %v178 = vpop.permute.xlu0 %177
    %181 = vset.pattern.permute.xlu0 0
    %182 = vperm.xlu0 %181, %v45
    %v183 = vpop.permute.xlu0 %182
    %186 = vset.pattern.permute.xlu0 0
    %187 = vperm.xlu0 %186, %v46
    %v188 = vpop.permute.xlu0 %187
    %191 = vset.pattern.permute.xlu0 0
    %192 = vperm.xlu0 %191, %v47
    %v193 = vpop.permute.xlu0 %192
    %196 = vset.pattern.permute.xlu0 0
    %197 = vperm.xlu0 %196, %v48
    %v198 = vpop.permute.xlu0 %197
    %201 = vset.pattern.permute.xlu0 0
    %202 = vperm.xlu0 %201, %v49
    %v203 = vpop.permute.xlu0 %202
    %206 = vset.pattern.permute.xlu0 0
    %207 = vperm.xlu0 %206, %v50
    %v208 = vpop.permute.xlu0 %207
    %211 = vset.pattern.permute.xlu0 0
    %212 = vperm.xlu0 %211, %v51
    %v213 = vpop.permute.xlu0 %212
    %216 = vset.pattern.permute.xlu0 0
    %217 = vperm.xlu0 %216, %v52
    %v218 = vpop.permute.xlu0 %217
    %221 = vset.pattern.permute.xlu0 0
    %222 = vperm.xlu0 %221, %v53
    %v223 = vpop.permute.xlu0 %222
    %226 = vset.pattern.permute.xlu0 0
    %227 = vperm.xlu0 %226, %v54
    %v228 = vpop.permute.xlu0 %227
    %231 = vset.pattern.permute.xlu0 0
    %232 = vperm.xlu0 %231, %v55
    %v233 = vpop.permute.xlu0 %232
    %236 = vset.pattern.permute.xlu0 0
    %237 = vperm.xlu0 %236, %v56
    %v238 = vpop.permute.xlu0 %237
    %v240 = vadd.f32 %v163, %v144
    %v241 = vadd.f32 %v168, %v145
    %v242 = vadd.f32 %v173, %v146
    %v243 = vadd.f32 %v178, %v147
    %v244 = vadd.f32 %v183, %v148
    %v245 = vadd.f32 %v188, %v149
    %v246 = vadd.f32 %v193, %v150
    %v247 = vadd.f32 %v198, %v151
    %v248 = vadd.f32 %v203, %v152
    %v249 = vadd.f32 %v208, %v153
    %v250 = vadd.f32 %v213, %v154
    %v251 = vadd.f32 %v218, %v155
    %v252 = vadd.f32 %v223, %v156
    %v253 = vadd.f32 %v228, %v157
    %v254 = vadd.f32 %v233, %v158
    %v255 = vadd.f32 %v238, %v159
    %v256 = vld [vmem:[%s1] sm:$0x1]
    %257 = vset.pattern.permute.xlu0 1
    %258 = vperm.xlu0 %257, %v25
    %v259 = vpop.permute.xlu0 %258
    %261 = vset.pattern.permute.xlu0 1
    %262 = vperm.xlu0 %261, %v26
    %v263 = vpop.permute.xlu0 %262
    %265 = vset.pattern.permute.xlu0 1
    %266 = vperm.xlu0 %265, %v27
    %v267 = vpop.permute.xlu0 %266
    %269 = vset.pattern.permute.xlu0 1
    %270 = vperm.xlu0 %269, %v28
    %v271 = vpop.permute.xlu0 %270
    %273 = vset.pattern.permute.xlu0 1
    %274 = vperm.xlu0 %273, %v29
    %v275 = vpop.permute.xlu0 %274
    %277 = vset.pattern.permute.xlu0 1
    %278 = vperm.xlu0 %277, %v30
    %v279 = vpop.permute.xlu0 %278
    %281 = vset.pattern.permute.xlu0 1
    %282 = vperm.xlu0 %281, %v31
    %v283 = vpop.permute.xlu0 %282
    %285 = vset.pattern.permute.xlu0 1
    %286 = vperm.xlu0 %285, %v32
    %v287 = vpop.permute.xlu0 %286
    %289 = vset.pattern.permute.xlu0 1
    %290 = vperm.xlu0 %289, %v33
    %v291 = vpop.permute.xlu0 %290
    %293 = vset.pattern.permute.xlu0 1
    %294 = vperm.xlu0 %293, %v34
    %v295 = vpop.permute.xlu0 %294
    %297 = vset.pattern.permute.xlu0 1
    %298 = vperm.xlu0 %297, %v35
    %v299 = vpop.permute.xlu0 %298
    %301 = vset.pattern.permute.xlu0 1
    %302 = vperm.xlu0 %301, %v36
    %v303 = vpop.permute.xlu0 %302
    %305 = vset.pattern.permute.xlu0 1
    %306 = vperm.xlu0 %305, %v37
    %v307 = vpop.permute.xlu0 %306
    %309 = vset.pattern.permute.xlu0 1
    %310 = vperm.xlu0 %309, %v38
    %v311 = vpop.permute.xlu0 %310
    %313 = vset.pattern.permute.xlu0 1
    %314 = vperm.xlu0 %313, %v39
    %v315 = vpop.permute.xlu0 %314
    %317 = vset.pattern.permute.xlu0 1
    %318 = vperm.xlu0 %317, %v40
    %v319 = vpop.permute.xlu0 %318
    %v322 = vlaneseq
    %v323 = vshrl.u32 %v322, 7
    %v324 = vsub.s32 0, %v323
    %v325 = vrot.slane %v256, %v324
    %v327 = vmul.f32 %v259, %v325
    %v328 = vmul.f32 %v263, %v325
    %v329 = vmul.f32 %v267, %v325
    %v330 = vmul.f32 %v271, %v325
    %v331 = vmul.f32 %v275, %v325
    %v332 = vmul.f32 %v279, %v325
    %v333 = vmul.f32 %v283, %v325
    %v334 = vmul.f32 %v287, %v325
    %v335 = vmul.f32 %v291, %v325
    %v336 = vmul.f32 %v295, %v325
    %v337 = vmul.f32 %v299, %v325
    %v338 = vmul.f32 %v303, %v325
    %v339 = vmul.f32 %v307, %v325
    %v340 = vmul.f32 %v311, %v325
    %v341 = vmul.f32 %v315, %v325
    %v342 = vmul.f32 %v319, %v325
    %v343 = vadd.f32 %v240, %v327
    %v344 = vadd.f32 %v241, %v328
    %v345 = vadd.f32 %v242, %v329
    %v346 = vadd.f32 %v243, %v330
    %v347 = vadd.f32 %v244, %v331
    %v348 = vadd.f32 %v245, %v332
    %v349 = vadd.f32 %v246, %v333
    %v350 = vadd.f32 %v247, %v334
    %v351 = vadd.f32 %v248, %v335
    %v352 = vadd.f32 %v249, %v336
    %v353 = vadd.f32 %v250, %v337
    %v354 = vadd.f32 %v251, %v338
    %v355 = vadd.f32 %v252, %v339
    %v356 = vadd.f32 %v253, %v340
    %v357 = vadd.f32 %v254, %v341
    %v358 = vadd.f32 %v255, %v342
    %v359 = vmax.f32 %v343, 0.0
    %v360 = vmax.f32 %v344, 0.0
    %v361 = vmax.f32 %v345, 0.0
    %v362 = vmax.f32 %v346, 0.0
    %v363 = vmax.f32 %v347, 0.0
    %v364 = vmax.f32 %v348, 0.0
    %v365 = vmax.f32 %v349, 0.0
    %v366 = vmax.f32 %v350, 0.0
    %v367 = vmax.f32 %v351, 0.0
    %v368 = vmax.f32 %v352, 0.0
    %v369 = vmax.f32 %v353, 0.0
    %v370 = vmax.f32 %v354, 0.0
    %v371 = vmax.f32 %v355, 0.0
    %v372 = vmax.f32 %v356, 0.0
    %v373 = vmax.f32 %v357, 0.0
    %v374 = vmax.f32 %v358, 0.0
    %v375 = vld [vmem:[%s4] sm:$0xff]
    %v376 = vld [vmem:[%s4 + $0x8] sm:$0xff]
    %v377 = vld [vmem:[%s4 + $0x10] sm:$0xff]
    %v378 = vld [vmem:[%s4 + $0x18] sm:$0xff]
    %v379 = vld [vmem:[%s4 + $0x20] sm:$0xff]
    %v380 = vld [vmem:[%s4 + $0x28] sm:$0xff]
    %v381 = vld [vmem:[%s4 + $0x30] sm:$0xff]
    %v382 = vld [vmem:[%s4 + $0x38] sm:$0xff]
    %v383 = vld [vmem:[%s4 + $0x40] sm:$0xff]
    %v384 = vld [vmem:[%s4 + $0x48] sm:$0xff]
    %v385 = vld [vmem:[%s4 + $0x50] sm:$0xff]
    %v386 = vld [vmem:[%s4 + $0x58] sm:$0xff]
    %v387 = vld [vmem:[%s4 + $0x60] sm:$0xff]
    %v388 = vld [vmem:[%s4 + $0x68] sm:$0xff]
    %v389 = vld [vmem:[%s4 + $0x70] sm:$0xff]
    %v390 = vld [vmem:[%s4 + $0x78] sm:$0xff]
    %392 = vset.pattern.permute.xlu0 0
    %393 = vperm.xlu0 %392, %v375
    %v394 = vpop.permute.xlu0 %393
    %397 = vset.pattern.permute.xlu0 0
    %398 = vperm.xlu0 %397, %v376
    %v399 = vpop.permute.xlu0 %398
    %402 = vset.pattern.permute.xlu0 0
    %403 = vperm.xlu0 %402, %v377
    %v404 = vpop.permute.xlu0 %403
    %407 = vset.pattern.permute.xlu0 0
    %408 = vperm.xlu0 %407, %v378
    %v409 = vpop.permute.xlu0 %408
    %412 = vset.pattern.permute.xlu0 0
    %413 = vperm.xlu0 %412, %v379
    %v414 = vpop.permute.xlu0 %413
    %417 = vset.pattern.permute.xlu0 0
    %418 = vperm.xlu0 %417, %v380
    %v419 = vpop.permute.xlu0 %418
    %422 = vset.pattern.permute.xlu0 0
    %423 = vperm.xlu0 %422, %v381
    %v424 = vpop.permute.xlu0 %423
    %427 = vset.pattern.permute.xlu0 0
    %428 = vperm.xlu0 %427, %v382
    %v429 = vpop.permute.xlu0 %428
    %432 = vset.pattern.permute.xlu0 0
    %433 = vperm.xlu0 %432, %v383
    %v434 = vpop.permute.xlu0 %433
    %437 = vset.pattern.permute.xlu0 0
    %438 = vperm.xlu0 %437, %v384
    %v439 = vpop.permute.xlu0 %438
    %442 = vset.pattern.permute.xlu0 0
    %443 = vperm.xlu0 %442, %v385
    %v444 = vpop.permute.xlu0 %443
    %447 = vset.pattern.permute.xlu0 0
    %448 = vperm.xlu0 %447, %v386
    %v449 = vpop.permute.xlu0 %448
    %452 = vset.pattern.permute.xlu0 0
    %453 = vperm.xlu0 %452, %v387
    %v454 = vpop.permute.xlu0 %453
    %457 = vset.pattern.permute.xlu0 0
    %458 = vperm.xlu0 %457, %v388
    %v459 = vpop.permute.xlu0 %458
    %462 = vset.pattern.permute.xlu0 0
    %463 = vperm.xlu0 %462, %v389
    %v464 = vpop.permute.xlu0 %463
    %467 = vset.pattern.permute.xlu0 0
    %468 = vperm.xlu0 %467, %v390
    %v469 = vpop.permute.xlu0 %468
    %v471 = vmul.f32 %v359, %v394
    %v472 = vmul.f32 %v360, %v399
    %v473 = vmul.f32 %v361, %v404
    %v474 = vmul.f32 %v362, %v409
    %v475 = vmul.f32 %v363, %v414
    %v476 = vmul.f32 %v364, %v419
    %v477 = vmul.f32 %v365, %v424
    %v478 = vmul.f32 %v366, %v429
    %v479 = vmul.f32 %v367, %v434
    %v480 = vmul.f32 %v368, %v439
    %v481 = vmul.f32 %v369, %v444
    %v482 = vmul.f32 %v370, %v449
    %v483 = vmul.f32 %v371, %v454
    %v484 = vmul.f32 %v372, %v459
    %v485 = vmul.f32 %v373, %v464
    %v486 = vmul.f32 %v374, %v469
    %v487 = vadd.f32 %v471, %v472
    %v488 = vadd.f32 %v487, %v473
    %v489 = vadd.f32 %v488, %v474
    %v490 = vadd.f32 %v489, %v475
    %v491 = vadd.f32 %v490, %v476
    %v492 = vadd.f32 %v491, %v477
    %v493 = vadd.f32 %v492, %v478
    %v494 = vadd.f32 %v493, %v479
    %v495 = vadd.f32 %v494, %v480
    %v496 = vadd.f32 %v495, %v481
    %v497 = vadd.f32 %v496, %v482
    %v498 = vadd.f32 %v497, %v483
    %v499 = vadd.f32 %v498, %v484
    %v500 = vadd.f32 %v499, %v485
    %v501 = vadd.f32 %v500, %v486
    %v502 = vrot.slane %v501, 4
    %v503 = vadd.f32 %v501, %v502
    %v504 = vrot.slane %v503, 2
    %v505 = vadd.f32 %v503, %v504
    %v506 = vrot.slane %v505, 1
    %v507 = vadd.f32 %v505, %v506
    %s508 = sld [smem:[#allocation2]]
    %v509 = vstv %s508
    %v510 = vadd.f32 %v507, %v509
    %v511 = vxor.u32 %v510, 2147483648
    %v512 = vmul.f32 %v511, 1.442695
    %v513 = vpow.pop %v512
    %v514 = vadd.f32 %v513, 1.0
    %v515 = vrcp.pop %v514
    %v516 = vmul.f32 1.0, %v515
    %517 = vst [vmem:[#allocation3] sm:$0x1] %v516
    // Predicated region
    $region26: #{tpu_custom_call.1} parent=1 // pred_check
      _
    $region27: #{tpu_custom_call.1} parent=1 // pred_check_branch
      %519 = sbr.rel (0) target = $region29
    $region28: #{tpu_custom_call.1} parent=1 // pred_region
      %s521 = ssub.s32 16, 16
      %522 = vsyncadd [#allocation4], %s521
      %s524 = sshll.u32 [#allocation3], 4
      %s525 = int_to_ptr.vmem [resolvable:$true] %s524
      %527 = dma.vmem_to_hbm [thread:$0]  %s525, 16, %s6, [#allocation4]
    $region29: #{tpu_custom_call.1} parent=1 // pred_fallthru
      _
    // Predicated region
    $region30: #{tpu_custom_call.1} parent=1 // pred_check
      _
    $region31: #{tpu_custom_call.1} parent=1 // pred_check_branch
      %529 = sbr.rel (0) target = $region33
    $region32: #{tpu_custom_call.1} parent=1 // pred_region
      %530 = dma.done [#allocation4], 16
    $region33: #{tpu_custom_call.1} parent=1 // pred_fallthru
      _
    %531 = vsyncpa [#allocation4], 1

</llo_original>
